<compile_context>
chip_gen: v6e
topology: v6e:2x2x1
jax: 0.10.0
libtpu: 0.0.40
codegen_flags: <defaults>
</compile_context>

<pallas_src>
import functools

import jax
import jax.numpy as jnp
from jax.experimental import pallas as pl
from jax.experimental.pallas import tpu as pltpu

LANE = 128      # lane width: pad only dims whose tiles reach HBM / the output store
BN_EPS = 1e-5   # PyTorch BatchNorm1d default


def _bn_relu(h, eps=BN_EPS):
    # Training-mode BatchNorm1d: full-batch biased variance, gamma=1, beta=0.
    mean = jnp.mean(h, axis=0, keepdims=True)
    var = jnp.mean(jnp.square(h - mean), axis=0, keepdims=True)
    return jnp.maximum((h - mean) * jax.lax.rsqrt(var + eps), 0.0)


def fnn_kernel(x_ref, w1_ref, w23_ref, b3_ref, o_ref, *, h1_dim):
    # x arrives f32; cast to bf16 here (cheap VPU op, hidden under the W1 DMA).
    x = x_ref[...].astype(jnp.bfloat16)

    # l1 (bias cancelled by batch-stat BN) -> bn1 -> relu.  N = h1_dim (unpadded).
    h1 = jnp.dot(x, w1_ref[...], preferred_element_type=jnp.float32)
    h1 = _bn_relu(h1)

    # w2 / w3 live in one fused (h1_dim + LANE, LANE) bf16 tile; static slices.
    w2 = w23_ref[pl.ds(0, h1_dim), :]       # (h1_dim, 128)
    w3 = w23_ref[pl.ds(h1_dim, LANE), :]    # (128, 128)

    # l2 (bias cancelled by BN) -> bn2 -> relu; zero-padded lanes stay exactly 0.
    h2 = jnp.dot(h1.astype(jnp.bfloat16), w2, preferred_element_type=jnp.float32)
    h2 = _bn_relu(h2)

    # out + softmax(dim=1); padded logit lanes carry a -1e30 bias -> exp == 0.
    logits = jnp.dot(h2.astype(jnp.bfloat16), w3,
                     preferred_element_type=jnp.float32) + b3_ref[...]
    m = jnp.max(logits, axis=1, keepdims=True)
    e = jnp.exp(logits - m)
    denom = jnp.sum(e, axis=1, keepdims=True)
    o_ref[...] = e / denom   # exact divide: rows sum to 1 to f32 precision


def pack_params(params):
    """Host-side, one-time: bf16 weights, lane-dense padding of hidden2/out,
    W2+W3 fused into a single tile, softmax padding folded into the out bias."""
    w1, _b1, w2, _b2, w3, b3 = params
    h1 = w1.shape[1]
    h2 = w2.shape[1]
    out = w3.shape[1]
    assert h1 % 16 == 0, "hidden1 must be a multiple of 16 (bf16 sublane pack)"

    # W1 stays (inp, hidden1): padding its N dim would only double the dominant DMA.
    w1p = w1.astype(jnp.bfloat16)

    # hidden2 / out padded to a full 128-lane vreg (last matmul + output store are
    # lane-dense); padded entries are exact zeros.
    w2p = jnp.pad(w2, ((0, 0), (0, LANE - h2)))                     # (h1, 128)
    w3p = jnp.pad(w3, ((0, LANE - h2), (0, LANE - out)))            # (128, 128)
    w23 = jnp.concatenate([w2p, w3p], axis=0).astype(jnp.bfloat16)  # (h1+128, 128)

    # Padded logit lanes get a huge negative bias so softmax assigns them 0 mass.
    b3p = jnp.pad(b3, ((0, 0), (0, LANE - out)),
                  constant_values=-1e30).astype(jnp.float32)        # (1, 128)
    return (w1p, w23, b3p), h1, out


@functools.partial(jax.jit, static_argnames=("h1_dim", "out_dim"))
def fnn_forward(x_nchw, packed, h1_dim, out_dim):
    """x_nchw: (B, C, H, W) f32 -> (B, out_dim) f32 softmax probabilities."""
    w1p, w23, b3p = packed
    B = x_nchw.shape[0]
    x_flat = x_nchw.reshape(B, -1)            # nn.Flatten; stays f32 into the kernel
    outp = w23.shape[1]

    vmem = pl.BlockSpec(memory_space=pltpu.MemorySpace.VMEM)
    y_pad = pl.pallas_call(
        functools.partial(fnn_kernel, h1_dim=h1_dim),
        out_shape=jax.ShapeDtypeStruct((B, outp), jnp.float32),
        in_specs=[vmem] * 4,
        out_specs=vmem,
    )(x_flat, w1p, w23, b3p)
    return y_pad[:, :out_dim]


def init_params(key, inp, hidden1, hidden2, out):
    """PyTorch-init params; Linear weights stored transposed as (in, out)."""
    ks = jax.random.split(key, 6)

    def linear(kw, kb, fan_in, fan_out):
        bound = 1.0 / jnp.sqrt(fan_in)
        w = jax.random.uniform(kw, (fan_in, fan_out), jnp.float32, -bound, bound)
        b = jax.random.uniform(kb, (1, fan_out), jnp.float32, -bound, bound)
        return w, b

    w1, b1 = linear(ks[0], ks[1], inp, hidden1)
    w2, b2 = linear(ks[2], ks[3], hidden1, hidden2)
    w3, b3 = linear(ks[4], ks[5], hidden2, out)
    return (w1, b1, w2, b2, w3, b3)


def fnn_reference(x_nchw, params, eps=BN_EPS):
    """Pure-JAX f32 reference of the PyTorch module (training-mode BN,
    gamma=1, beta=0, biases included — they cancel exactly in BN)."""
    w1, b1, w2, b2, w3, b3 = params
    x = x_nchw.reshape(x_nchw.shape[0], -1)

    def bn(h):
        mean = jnp.mean(h, axis=0, keepdims=True)
        var = jnp.mean(jnp.square(h - mean), axis=0, keepdims=True)
        return (h - mean) / jnp.sqrt(var + eps)

    h = jax.nn.relu(bn(x @ w1 + b1))
    h = jax.nn.relu(bn(h @ w2 + b2))
    return jax.nn.softmax(h @ w3 + b3, axis=1)


if __name__ == "__main__":
    key = jax.random.PRNGKey(0)
    k_x, k_p = jax.random.split(key)

    # Small shapes: NCHW input (8, 4, 16, 16) -> inp = 4*16*16 = 1024
    B, C, H, W = 8, 4, 16, 16
    inp, hidden1, hidden2, out = C * H * W, 64, 32, 10

    x = jax.random.normal(k_x, (B, C, H, W), jnp.float32)
    params = init_params(k_p, inp, hidden1, hidden2, out)
    packed, h1_dim, out_dim = pack_params(params)

    y = fnn_forward(x, packed, h1_dim, out_dim)
    y = jax.block_until_ready(y)

    assert y.shape == (B, out)
    # Exact-divide softmax: rows sum to 1 to f32 precision; no mass on padded lanes.
    assert jnp.allclose(jnp.sum(y, axis=1), 1.0, atol=1e-4)
    assert bool(jnp.all(y >= 0.0))

    # Parity with the f32 reference of the module (bf16 weight path -> loose tol).
    y_ref = fnn_reference(x, params)
    assert jnp.allclose(y, y_ref, atol=5e-2), float(jnp.max(jnp.abs(y - y_ref)))

    print("KERNEL_OK")
</pallas_src>

<mosaic_0001>
module attributes {stable_mosaic.version = 11 : i64} {
  func.func @fnn_kernel(%arg0: memref<8x1024xf32, #tpu.memory_space<vmem>>, %arg1: memref<1024x64xbf16, #tpu.memory_space<vmem>>, %arg2: memref<192x128xbf16, #tpu.memory_space<vmem>>, %arg3: memref<1x128xf32, #tpu.memory_space<vmem>>, %arg4: memref<8x128xf32, #tpu.memory_space<vmem>>) attributes {dimension_semantics = [], scalar_prefetch = 0 : i64, scratch_operands = 0 : i64, tpu.core_type = #tpu.core_type<tc>} {
    %c0 = arith.constant 0 : index
    %c0_0 = arith.constant 0 : index
    %0 = vector.load %arg0[%c0, %c0_0] : memref<8x1024xf32, #tpu.memory_space<vmem>>, vector<8x1024xf32>
    %1 = arith.truncf %0 : vector<8x1024xf32> to vector<8x1024xbf16>
    %c0_1 = arith.constant 0 : index
    %c0_2 = arith.constant 0 : index
    %2 = vector.load %arg1[%c0_1, %c0_2] : memref<1024x64xbf16, #tpu.memory_space<vmem>>, vector<1024x64xbf16>
    %cst = arith.constant dense<0.000000e+00> : vector<8x64xf32>
    %3 = tpu.matmul %1, %2, %cst {dimension_numbers = #tpu.dot_dimension_numbers<[1], [0], [0], [1], [0, 0, 1, 1], [], []>} : vector<8x1024xbf16>, vector<1024x64xbf16>, vector<8x64xf32> -> vector<8x64xf32>
    %cst_3 = arith.constant dense<0.000000e+00> : vector<64xf32>
    %4 = vector.multi_reduction <add>, %3, %cst_3 [0] : vector<8x64xf32> to vector<64xf32>
    %5 = vector.shape_cast %4 : vector<64xf32> to vector<1x64xf32>
    %cst_4 = arith.constant 8.000000e+00 : f32
    %6 = vector.broadcast %cst_4 : f32 to vector<1x64xf32>
    %7 = arith.divf %5, %6 : vector<1x64xf32>
    %8 = vector.broadcast %7 : vector<1x64xf32> to vector<8x64xf32>
    %9 = arith.subf %3, %8 : vector<8x64xf32>
    %10 = arith.mulf %9, %9 : vector<8x64xf32>
    %cst_5 = arith.constant dense<0.000000e+00> : vector<64xf32>
    %11 = vector.multi_reduction <add>, %10, %cst_5 [0] : vector<8x64xf32> to vector<64xf32>
    %12 = vector.shape_cast %11 : vector<64xf32> to vector<1x64xf32>
    %cst_6 = arith.constant 8.000000e+00 : f32
    %13 = vector.broadcast %cst_6 : f32 to vector<1x64xf32>
    %14 = arith.divf %12, %13 : vector<1x64xf32>
    %15 = vector.broadcast %7 : vector<1x64xf32> to vector<8x64xf32>
    %16 = arith.subf %3, %15 : vector<8x64xf32>
    %cst_7 = arith.constant 9.99999974E-6 : f32
    %17 = vector.broadcast %cst_7 : f32 to vector<1x64xf32>
    %18 = arith.addf %14, %17 : vector<1x64xf32>
    %19 = math.rsqrt %18 : vector<1x64xf32>
    %20 = vector.broadcast %19 : vector<1x64xf32> to vector<8x64xf32>
    %21 = arith.mulf %16, %20 : vector<8x64xf32>
    %cst_8 = arith.constant 0.000000e+00 : f32
    %22 = vector.broadcast %cst_8 : f32 to vector<8x64xf32>
    %23 = arith.maximumf %21, %22 : vector<8x64xf32>
    %c0_9 = arith.constant 0 : index
    %c0_10 = arith.constant 0 : index
    %24 = vector.load %arg2[%c0_9, %c0_10] : memref<192x128xbf16, #tpu.memory_space<vmem>>, vector<64x128xbf16>
    %c64 = arith.constant 64 : index
    %c0_11 = arith.constant 0 : index
    %25 = vector.load %arg2[%c64, %c0_11] : memref<192x128xbf16, #tpu.memory_space<vmem>>, vector<128x128xbf16>
    %26 = arith.truncf %23 : vector<8x64xf32> to vector<8x64xbf16>
    %cst_12 = arith.constant dense<0.000000e+00> : vector<8x128xf32>
    %27 = tpu.matmul %26, %24, %cst_12 {dimension_numbers = #tpu.dot_dimension_numbers<[1], [0], [0], [1], [0, 0, 1, 1], [], []>} : vector<8x64xbf16>, vector<64x128xbf16>, vector<8x128xf32> -> vector<8x128xf32>
    %cst_13 = arith.constant dense<0.000000e+00> : vector<128xf32>
    %28 = vector.multi_reduction <add>, %27, %cst_13 [0] : vector<8x128xf32> to vector<128xf32>
    %29 = vector.shape_cast %28 : vector<128xf32> to vector<1x128xf32>
    %cst_14 = arith.constant 8.000000e+00 : f32
    %30 = vector.broadcast %cst_14 : f32 to vector<1x128xf32>
    %31 = arith.divf %29, %30 : vector<1x128xf32>
    %32 = vector.broadcast %31 : vector<1x128xf32> to vector<8x128xf32>
    %33 = arith.subf %27, %32 : vector<8x128xf32>
    %34 = arith.mulf %33, %33 : vector<8x128xf32>
    %cst_15 = arith.constant dense<0.000000e+00> : vector<128xf32>
    %35 = vector.multi_reduction <add>, %34, %cst_15 [0] : vector<8x128xf32> to vector<128xf32>
    %36 = vector.shape_cast %35 : vector<128xf32> to vector<1x128xf32>
    %cst_16 = arith.constant 8.000000e+00 : f32
    %37 = vector.broadcast %cst_16 : f32 to vector<1x128xf32>
    %38 = arith.divf %36, %37 : vector<1x128xf32>
    %39 = vector.broadcast %31 : vector<1x128xf32> to vector<8x128xf32>
    %40 = arith.subf %27, %39 : vector<8x128xf32>
    %cst_17 = arith.constant 9.99999974E-6 : f32
    %41 = vector.broadcast %cst_17 : f32 to vector<1x128xf32>
    %42 = arith.addf %38, %41 : vector<1x128xf32>
    %43 = math.rsqrt %42 : vector<1x128xf32>
    %44 = vector.broadcast %43 : vector<1x128xf32> to vector<8x128xf32>
    %45 = arith.mulf %40, %44 : vector<8x128xf32>
    %cst_18 = arith.constant 0.000000e+00 : f32
    %46 = vector.broadcast %cst_18 : f32 to vector<8x128xf32>
    %47 = arith.maximumf %45, %46 : vector<8x128xf32>
    %48 = arith.truncf %47 : vector<8x128xf32> to vector<8x128xbf16>
    %cst_19 = arith.constant dense<0.000000e+00> : vector<8x128xf32>
    %49 = tpu.matmul %48, %25, %cst_19 {dimension_numbers = #tpu.dot_dimension_numbers<[1], [0], [0], [1], [0, 0, 1, 1], [], []>} : vector<8x128xbf16>, vector<128x128xbf16>, vector<8x128xf32> -> vector<8x128xf32>
    %c0_20 = arith.constant 0 : index
    %c0_21 = arith.constant 0 : index
    %50 = vector.load %arg3[%c0_20, %c0_21] : memref<1x128xf32, #tpu.memory_space<vmem>>, vector<1x128xf32>
    %51 = vector.broadcast %50 : vector<1x128xf32> to vector<8x128xf32>
    %52 = arith.addf %49, %51 : vector<8x128xf32>
    %cst_22 = arith.constant dense<0xFF800000> : vector<8xf32>
    %53 = vector.multi_reduction <maximumf>, %52, %cst_22 [1] : vector<8x128xf32> to vector<8xf32>
    %54 = vector.shape_cast %53 : vector<8xf32> to vector<8x1xf32>
    %55 = vector.broadcast %54 : vector<8x1xf32> to vector<8x128xf32>
    %56 = arith.subf %52, %55 : vector<8x128xf32>
    %57 = math.exp %56 : vector<8x128xf32>
    %cst_23 = arith.constant dense<0.000000e+00> : vector<8xf32>
    %58 = vector.multi_reduction <add>, %57, %cst_23 [1] : vector<8x128xf32> to vector<8xf32>
    %59 = vector.shape_cast %58 : vector<8xf32> to vector<8x1xf32>
    %60 = vector.broadcast %59 : vector<8x1xf32> to vector<8x128xf32>
    %61 = arith.divf %57, %60 : vector<8x128xf32>
    %c0_24 = arith.constant 0 : index
    %c0_25 = arith.constant 0 : index
    %62 = vector.load %arg4[%c0_24, %c0_25] : memref<8x128xf32, #tpu.memory_space<vmem>>, vector<8x128xf32>
    tpu.vector_store %arg4[%c0_24, %c0_25], %61 {strides = array<i32>} : memref<8x128xf32, #tpu.memory_space<vmem>>, vector<8x128xf32>,
    return
  }
}

</mosaic_0001>

<llo_original>
// kernel: fnn_forward.1
$region0: #{fnn_forward.1}
  #allocation0 [shape = 'u32[]', space=smem, size = 0x4, offset = 0x4, fixed_abs, tag = 'smem constant byte address 0x4 - core index']
  #allocation1 [shape = 'u32[144,128]{1,0:T(1,128)}', space=vmem, size = 0x12000, scoped, tag = 'internal scratch']
  %s0 = inlined_call_operand.vmem [shape: f32[8,1024], index: 0, kind: input, shape index: {}]
  %s1 = inlined_call_operand.vmem [shape: bf16[1024,64], index: 1, kind: input, shape index: {}]
  %s2 = inlined_call_operand.vmem [shape: bf16[192,128], index: 2, kind: input, shape index: {}]
  %s3 = inlined_call_operand.vmem [shape: f32[1,128], index: 3, kind: input, shape index: {}]
  %s4 = inlined_call_operand.hbm [shape: f32[8,128], index: 4, kind: output, shape index: {}]
  %s5 = sld [smem:[#allocation0]]
  $region26: #{fnn_forward.1} parent=0
    _
  %s7 = ssub.s32 1, %s5
  %s8 = scalar_select 0, %s7, %s5
  $region1: #{fnn_forward.1} parent=0
    #allocation2 [shape = 'u8[4096]{0}', space=vmem, size = 0x1000, scoped, tag = 'output window, operand 0, single buffered']
    #allocation3 [shape = 's32[1]{0}', space=sflag, size = 0x4, scoped, tag = 'scoped memory for fnn_forward.1']
    %9 = vsyncpa [#allocation3], 0
    // Predicated region
    $region2: #{fnn_forward.1} parent=1 // pred_check
      _
    $region3: #{fnn_forward.1} parent=1 // pred_check_branch
      %11 = sbr.rel (0) target = $region5
    $region4: #{fnn_forward.1} parent=1 // pred_region
      _
    $region5: #{fnn_forward.1} parent=1 // pred_fallthru
      _
    // Predicated region
    $region6: #{fnn_forward.1} parent=1 // pred_check
      _
    $region7: #{fnn_forward.1} parent=1 // pred_check_branch
      %13 = sbr.rel (0) target = $region9
    $region8: #{fnn_forward.1} parent=1 // pred_region
      _
    $region9: #{fnn_forward.1} parent=1 // pred_fallthru
      _
    // Predicated region
    $region10: #{fnn_forward.1} parent=1 // pred_check
      _
    $region11: #{fnn_forward.1} parent=1 // pred_check_branch
      %15 = sbr.rel (0) target = $region13
    $region12: #{fnn_forward.1} parent=1 // pred_region
      _
    $region13: #{fnn_forward.1} parent=1 // pred_fallthru
      _
    // Predicated region
    $region14: #{fnn_forward.1} parent=1 // pred_check
      _
    $region15: #{fnn_forward.1} parent=1 // pred_check_branch
      %17 = sbr.rel (0) target = $region17
    $region16: #{fnn_forward.1} parent=1 // pred_region
      _
    $region17: #{fnn_forward.1} parent=1 // pred_fallthru
      _
    %v19 = vld [vmem:[%s0] sm:$0xff]
    %v20 = vld [vmem:[%s0 + $0x8] sm:$0xff]
    %v21 = vld [vmem:[%s0 + $0x10] sm:$0xff]
    %v22 = vld [vmem:[%s0 + $0x18] sm:$0xff]
    %v23 = vld [vmem:[%s0 + $0x20] sm:$0xff]
    %v24 = vld [vmem:[%s0 + $0x28] sm:$0xff]
    %v25 = vld [vmem:[%s0 + $0x30] sm:$0xff]
    %v26 = vld [vmem:[%s0 + $0x38] sm:$0xff]
    %v27 = vpack.c.bf16 %v19, %v19
    %v28 = vpack.c.bf16 %v20, %v20
    %v29 = vpack.c.bf16 %v21, %v21
    %v30 = vpack.c.bf16 %v22, %v22
    %v31 = vpack.c.bf16 %v23, %v23
    %v32 = vpack.c.bf16 %v24, %v24
    %v33 = vpack.c.bf16 %v25, %v25
    %v34 = vpack.c.bf16 %v26, %v26
    %v35 = vld [vmem:[%s1] sm:$0xf]
    %v36 = vld [vmem:[%s1 + $0x4] sm:$0xf]
    %v37 = vld [vmem:[%s1 + $0x8] sm:$0xf]
    %v38 = vld [vmem:[%s1 + $0xc] sm:$0xf]
    %v39 = vld [vmem:[%s1 + $0x10] sm:$0xf]
    %v40 = vld [vmem:[%s1 + $0x14] sm:$0xf]
    %v41 = vld [vmem:[%s1 + $0x18] sm:$0xf]
    %v42 = vld [vmem:[%s1 + $0x1c] sm:$0xf]
    %v43 = vld [vmem:[%s1 + $0x20] sm:$0xf]
    %v44 = vld [vmem:[%s1 + $0x24] sm:$0xf]
    %v45 = vld [vmem:[%s1 + $0x28] sm:$0xf]
    %v46 = vld [vmem:[%s1 + $0x2c] sm:$0xf]
    %v47 = vld [vmem:[%s1 + $0x30] sm:$0xf]
    %v48 = vld [vmem:[%s1 + $0x34] sm:$0xf]
    %v49 = vld [vmem:[%s1 + $0x38] sm:$0xf]
    %v50 = vld [vmem:[%s1 + $0x3c] sm:$0xf]
    %v51 = vld [vmem:[%s1 + $0x40] sm:$0xf]
    %v52 = vld [vmem:[%s1 + $0x44] sm:$0xf]
    %v53 = vld [vmem:[%s1 + $0x48] sm:$0xf]
    %v54 = vld [vmem:[%s1 + $0x4c] sm:$0xf]
    %v55 = vld [vmem:[%s1 + $0x50] sm:$0xf]
    %v56 = vld [vmem:[%s1 + $0x54] sm:$0xf]
    %v57 = vld [vmem:[%s1 + $0x58] sm:$0xf]
    %v58 = vld [vmem:[%s1 + $0x5c] sm:$0xf]
    %v59 = vld [vmem:[%s1 + $0x60] sm:$0xf]
    %v60 = vld [vmem:[%s1 + $0x64] sm:$0xf]
    %v61 = vld [vmem:[%s1 + $0x68] sm:$0xf]
    %v62 = vld [vmem:[%s1 + $0x6c] sm:$0xf]
    %v63 = vld [vmem:[%s1 + $0x70] sm:$0xf]
    %v64 = vld [vmem:[%s1 + $0x74] sm:$0xf]
    %v65 = vld [vmem:[%s1 + $0x78] sm:$0xf]
    %v66 = vld [vmem:[%s1 + $0x7c] sm:$0xf]
    %v67 = vld [vmem:[%s1 + $0x80] sm:$0xf]
    %v68 = vld [vmem:[%s1 + $0x84] sm:$0xf]
    %v69 = vld [vmem:[%s1 + $0x88] sm:$0xf]
    %v70 = vld [vmem:[%s1 + $0x8c] sm:$0xf]
    %v71 = vld [vmem:[%s1 + $0x90] sm:$0xf]
    %v72 = vld [vmem:[%s1 + $0x94] sm:$0xf]
    %v73 = vld [vmem:[%s1 + $0x98] sm:$0xf]
    %v74 = vld [vmem:[%s1 + $0x9c] sm:$0xf]
    %v75 = vld [vmem:[%s1 + $0xa0] sm:$0xf]
    %v76 = vld [vmem:[%s1 + $0xa4] sm:$0xf]
    %v77 = vld [vmem:[%s1 + $0xa8] sm:$0xf]
    %v78 = vld [vmem:[%s1 + $0xac] sm:$0xf]
    %v79 = vld [vmem:[%s1 + $0xb0] sm:$0xf]
    %v80 = vld [vmem:[%s1 + $0xb4] sm:$0xf]
    %v81 = vld [vmem:[%s1 + $0xb8] sm:$0xf]
    %v82 = vld [vmem:[%s1 + $0xbc] sm:$0xf]
    %v83 = vld [vmem:[%s1 + $0xc0] sm:$0xf]
    %v84 = vld [vmem:[%s1 + $0xc4] sm:$0xf]
    %v85 = vld [vmem:[%s1 + $0xc8] sm:$0xf]
    %v86 = vld [vmem:[%s1 + $0xcc] sm:$0xf]
    %v87 = vld [vmem:[%s1 + $0xd0] sm:$0xf]
    %v88 = vld [vmem:[%s1 + $0xd4] sm:$0xf]
    %v89 = vld [vmem:[%s1 + $0xd8] sm:$0xf]
    %v90 = vld [vmem:[%s1 + $0xdc] sm:$0xf]
    %v91 = vld [vmem:[%s1 + $0xe0] sm:$0xf]
    %v92 = vld [vmem:[%s1 + $0xe4] sm:$0xf]
    %v93 = vld [vmem:[%s1 + $0xe8] sm:$0xf]
    %v94 = vld [vmem:[%s1 + $0xec] sm:$0xf]
    %v95 = vld [vmem:[%s1 + $0xf0] sm:$0xf]
    %v96 = vld [vmem:[%s1 + $0xf4] sm:$0xf]
    %v97 = vld [vmem:[%s1 + $0xf8] sm:$0xf]
    %v98 = vld [vmem:[%s1 + $0xfc] sm:$0xf]
    %v99 = vld [vmem:[%s1 + $0x100] sm:$0xf]
    %v100 = vld [vmem:[%s1 + $0x104] sm:$0xf]
    %v101 = vld [vmem:[%s1 + $0x108] sm:$0xf]
    %v102 = vld [vmem:[%s1 + $0x10c] sm:$0xf]
    %v103 = vld [vmem:[%s1 + $0x110] sm:$0xf]
    %v104 = vld [vmem:[%s1 + $0x114] sm:$0xf]
    %v105 = vld [vmem:[%s1 + $0x118] sm:$0xf]
    %v106 = vld [vmem:[%s1 + $0x11c] sm:$0xf]
    %v107 = vld [vmem:[%s1 + $0x120] sm:$0xf]
    %v108 = vld [vmem:[%s1 + $0x124] sm:$0xf]
    %v109 = vld [vmem:[%s1 + $0x128] sm:$0xf]
    %v110 = vld [vmem:[%s1 + $0x12c] sm:$0xf]
    %v111 = vld [vmem:[%s1 + $0x130] sm:$0xf]
    %v112 = vld [vmem:[%s1 + $0x134] sm:$0xf]
    %v113 = vld [vmem:[%s1 + $0x138] sm:$0xf]
    %v114 = vld [vmem:[%s1 + $0x13c] sm:$0xf]
    %v115 = vld [vmem:[%s1 + $0x140] sm:$0xf]
    %v116 = vld [vmem:[%s1 + $0x144] sm:$0xf]
    %v117 = vld [vmem:[%s1 + $0x148] sm:$0xf]
    %v118 = vld [vmem:[%s1 + $0x14c] sm:$0xf]
    %v119 = vld [vmem:[%s1 + $0x150] sm:$0xf]
    %v120 = vld [vmem:[%s1 + $0x154] sm:$0xf]
    %v121 = vld [vmem:[%s1 + $0x158] sm:$0xf]
    %v122 = vld [vmem:[%s1 + $0x15c] sm:$0xf]
    %v123 = vld [vmem:[%s1 + $0x160] sm:$0xf]
    %v124 = vld [vmem:[%s1 + $0x164] sm:$0xf]
    %v125 = vld [vmem:[%s1 + $0x168] sm:$0xf]
    %v126 = vld [vmem:[%s1 + $0x16c] sm:$0xf]
    %v127 = vld [vmem:[%s1 + $0x170] sm:$0xf]
    %v128 = vld [vmem:[%s1 + $0x174] sm:$0xf]
    %v129 = vld [vmem:[%s1 + $0x178] sm:$0xf]
    %v130 = vld [vmem:[%s1 + $0x17c] sm:$0xf]
    %v131 = vld [vmem:[%s1 + $0x180] sm:$0xf]
    %v132 = vld [vmem:[%s1 + $0x184] sm:$0xf]
    %v133 = vld [vmem:[%s1 + $0x188] sm:$0xf]
    %v134 = vld [vmem:[%s1 + $0x18c] sm:$0xf]
    %v135 = vld [vmem:[%s1 + $0x190] sm:$0xf]
    %v136 = vld [vmem:[%s1 + $0x194] sm:$0xf]
    %v137 = vld [vmem:[%s1 + $0x198] sm:$0xf]
    %v138 = vld [vmem:[%s1 + $0x19c] sm:$0xf]
    %v139 = vld [vmem:[%s1 + $0x1a0] sm:$0xf]
    %v140 = vld [vmem:[%s1 + $0x1a4] sm:$0xf]
    %v141 = vld [vmem:[%s1 + $0x1a8] sm:$0xf]
    %v142 = vld [vmem:[%s1 + $0x1ac] sm:$0xf]
    %v143 = vld [vmem:[%s1 + $0x1b0] sm:$0xf]
    %v144 = vld [vmem:[%s1 + $0x1b4] sm:$0xf]
    %v145 = vld [vmem:[%s1 + $0x1b8] sm:$0xf]
    %v146 = vld [vmem:[%s1 + $0x1bc] sm:$0xf]
    %v147 = vld [vmem:[%s1 + $0x1c0] sm:$0xf]
    %v148 = vld [vmem:[%s1 + $0x1c4] sm:$0xf]
    %v149 = vld [vmem:[%s1 + $0x1c8] sm:$0xf]
    %v150 = vld [vmem:[%s1 + $0x1cc] sm:$0xf]
    %v151 = vld [vmem:[%s1 + $0x1d0] sm:$0xf]
    %v152 = vld [vmem:[%s1 + $0x1d4] sm:$0xf]
    %v153 = vld [vmem:[%s1 + $0x1d8] sm:$0xf]
    %v154 = vld [vmem:[%s1 + $0x1dc] sm:$0xf]
    %v155 = vld [vmem:[%s1 + $0x1e0] sm:$0xf]
    %v156 = vld [vmem:[%s1 + $0x1e4] sm:$0xf]
    %v157 = vld [vmem:[%s1 + $0x1e8] sm:$0xf]
    %v158 = vld [vmem:[%s1 + $0x1ec] sm:$0xf]
    %v159 = vld [vmem:[%s1 + $0x1f0] sm:$0xf]
    %v160 = vld [vmem:[%s1 + $0x1f4] sm:$0xf]
    %v161 = vld [vmem:[%s1 + $0x1f8] sm:$0xf]
    %v162 = vld [vmem:[%s1 + $0x1fc] sm:$0xf]
    %v291 = vunpack.c.l.b16 %v35
    %v292 = vunpack.c.l.b16 %v36
    %v293 = vunpack.c.l.b16 %v37
    %v294 = vunpack.c.l.b16 %v38
    %v295 = vunpack.c.l.b16 %v39
    %v296 = vunpack.c.l.b16 %v40
    %v297 = vunpack.c.l.b16 %v41
    %v298 = vunpack.c.l.b16 %v42
    %v299 = vunpack.c.l.b16 %v43
    %v300 = vunpack.c.l.b16 %v44
    %v301 = vunpack.c.l.b16 %v45
    %v302 = vunpack.c.l.b16 %v46
    %v303 = vunpack.c.l.b16 %v47
    %v304 = vunpack.c.l.b16 %v48
    %v305 = vunpack.c.l.b16 %v49
    %v306 = vunpack.c.l.b16 %v50
    %v307 = vunpack.c.l.b16 %v51
    %v308 = vunpack.c.l.b16 %v52
    %v309 = vunpack.c.l.b16 %v53
    %v310 = vunpack.c.l.b16 %v54
    %v311 = vunpack.c.l.b16 %v55
    %v312 = vunpack.c.l.b16 %v56
    %v313 = vunpack.c.l.b16 %v57
    %v314 = vunpack.c.l.b16 %v58
    %v315 = vunpack.c.l.b16 %v59
    %v316 = vunpack.c.l.b16 %v60
    %v317 = vunpack.c.l.b16 %v61
    %v318 = vunpack.c.l.b16 %v62
    %v319 = vunpack.c.l.b16 %v63
    %v320 = vunpack.c.l.b16 %v64
    %v321 = vunpack.c.l.b16 %v65
    %v322 = vunpack.c.l.b16 %v66
    %v323 = vunpack.c.l.b16 %v67
    %v324 = vunpack.c.l.b16 %v68
    %v325 = vunpack.c.l.b16 %v69
    %v326 = vunpack.c.l.b16 %v70
    %v327 = vunpack.c.l.b16 %v71
    %v328 = vunpack.c.l.b16 %v72
    %v329 = vunpack.c.l.b16 %v73
    %v330 = vunpack.c.l.b16 %v74
    %v331 = vunpack.c.l.b16 %v75
    %v332 = vunpack.c.l.b16 %v76
    %v333 = vunpack.c.l.b16 %v77
    %v334 = vunpack.c.l.b16 %v78
    %v335 = vunpack.c.l.b16 %v79
    %v336 = vunpack.c.l.b16 %v80
    %v337 = vunpack.c.l.b16 %v81
    %v338 = vunpack.c.l.b16 %v82
    %v339 = vunpack.c.l.b16 %v83
    %v340 = vunpack.c.l.b16 %v84
    %v341 = vunpack.c.l.b16 %v85
    %v342 = vunpack.c.l.b16 %v86
    %v343 = vunpack.c.l.b16 %v87
    %v344 = vunpack.c.l.b16 %v88
    %v345 = vunpack.c.l.b16 %v89
    %v346 = vunpack.c.l.b16 %v90
    %v347 = vunpack.c.l.b16 %v91
    %v348 = vunpack.c.l.b16 %v92
    %v349 = vunpack.c.l.b16 %v93
    %v350 = vunpack.c.l.b16 %v94
    %v351 = vunpack.c.l.b16 %v95
    %v352 = vunpack.c.l.b16 %v96
    %v353 = vunpack.c.l.b16 %v97
    %v354 = vunpack.c.l.b16 %v98
    %v355 = vunpack.c.l.b16 %v99
    %v356 = vunpack.c.l.b16 %v100
    %v357 = vunpack.c.l.b16 %v101
    %v358 = vunpack.c.l.b16 %v102
    %v359 = vunpack.c.l.b16 %v103
    %v360 = vunpack.c.l.b16 %v104
    %v361 = vunpack.c.l.b16 %v105
    %v362 = vunpack.c.l.b16 %v106
    %v363 = vunpack.c.l.b16 %v107
    %v364 = vunpack.c.l.b16 %v108
    %v365 = vunpack.c.l.b16 %v109
    %v366 = vunpack.c.l.b16 %v110
    %v367 = vunpack.c.l.b16 %v111
    %v368 = vunpack.c.l.b16 %v112
    %v369 = vunpack.c.l.b16 %v113
    %v370 = vunpack.c.l.b16 %v114
    %v371 = vunpack.c.l.b16 %v115
    %v372 = vunpack.c.l.b16 %v116
    %v373 = vunpack.c.l.b16 %v117
    %v374 = vunpack.c.l.b16 %v118
    %v375 = vunpack.c.l.b16 %v119
    %v376 = vunpack.c.l.b16 %v120
    %v377 = vunpack.c.l.b16 %v121
    %v378 = vunpack.c.l.b16 %v122
    %v379 = vunpack.c.l.b16 %v123
    %v380 = vunpack.c.l.b16 %v124
    %v381 = vunpack.c.l.b16 %v125
    %v382 = vunpack.c.l.b16 %v126
    %v383 = vunpack.c.l.b16 %v127
    %v384 = vunpack.c.l.b16 %v128
    %v385 = vunpack.c.l.b16 %v129
    %v386 = vunpack.c.l.b16 %v130
    %v387 = vunpack.c.l.b16 %v131
    %v388 = vunpack.c.l.b16 %v132
    %v389 = vunpack.c.l.b16 %v133
    %v390 = vunpack.c.l.b16 %v134
    %v391 = vunpack.c.l.b16 %v135
    %v392 = vunpack.c.l.b16 %v136
    %v393 = vunpack.c.l.b16 %v137
    %v394 = vunpack.c.l.b16 %v138
    %v395 = vunpack.c.l.b16 %v139
    %v396 = vunpack.c.l.b16 %v140
    %v397 = vunpack.c.l.b16 %v141
    %v398 = vunpack.c.l.b16 %v142
    %v399 = vunpack.c.l.b16 %v143
    %v400 = vunpack.c.l.b16 %v144
    %v401 = vunpack.c.l.b16 %v145
    %v402 = vunpack.c.l.b16 %v146
    %v403 = vunpack.c.l.b16 %v147
    %v404 = vunpack.c.l.b16 %v148
    %v405 = vunpack.c.l.b16 %v149
    %v406 = vunpack.c.l.b16 %v150
    %v407 = vunpack.c.l.b16 %v151
    %v408 = vunpack.c.l.b16 %v152
    %v409 = vunpack.c.l.b16 %v153
    %v410 = vunpack.c.l.b16 %v154
    %v411 = vunpack.c.l.b16 %v155
    %v412 = vunpack.c.l.b16 %v156
    %v413 = vunpack.c.l.b16 %v157
    %v414 = vunpack.c.l.b16 %v158
    %v415 = vunpack.c.l.b16 %v159
    %v416 = vunpack.c.l.b16 %v160
    %v417 = vunpack.c.l.b16 %v161
    %v418 = vunpack.c.l.b16 %v162
    %v419 = vpack.c.b16 %v292, %v291
    %v420 = vpack.c.b16 %v294, %v293
    %v421 = vpack.c.b16 %v296, %v295
    %v422 = vpack.c.b16 %v298, %v297
    %v423 = vpack.c.b16 %v300, %v299
    %v424 = vpack.c.b16 %v302, %v301
    %v425 = vpack.c.b16 %v304, %v303
    %v426 = vpack.c.b16 %v306, %v305
    %v427 = vpack.c.b16 %v308, %v307
    %v428 = vpack.c.b16 %v310, %v309
    %v429 = vpack.c.b16 %v312, %v311
    %v430 = vpack.c.b16 %v314, %v313
    %v431 = vpack.c.b16 %v316, %v315
    %v432 = vpack.c.b16 %v318, %v317
    %v433 = vpack.c.b16 %v320, %v319
    %v434 = vpack.c.b16 %v322, %v321
    %v435 = vpack.c.b16 %v324, %v323
    %v436 = vpack.c.b16 %v326, %v325
    %v437 = vpack.c.b16 %v328, %v327
    %v438 = vpack.c.b16 %v330, %v329
    %v439 = vpack.c.b16 %v332, %v331
    %v440 = vpack.c.b16 %v334, %v333
    %v441 = vpack.c.b16 %v336, %v335
    %v442 = vpack.c.b16 %v338, %v337
    %v443 = vpack.c.b16 %v340, %v339
    %v444 = vpack.c.b16 %v342, %v341
    %v445 = vpack.c.b16 %v344, %v343
    %v446 = vpack.c.b16 %v346, %v345
    %v447 = vpack.c.b16 %v348, %v347
    %v448 = vpack.c.b16 %v350, %v349
    %v449 = vpack.c.b16 %v352, %v351
    %v450 = vpack.c.b16 %v354, %v353
    %v451 = vpack.c.b16 %v356, %v355
    %v452 = vpack.c.b16 %v358, %v357
    %v453 = vpack.c.b16 %v360, %v359
    %v454 = vpack.c.b16 %v362, %v361
    %v455 = vpack.c.b16 %v364, %v363
    %v456 = vpack.c.b16 %v366, %v365
    %v457 = vpack.c.b16 %v368, %v367
    %v458 = vpack.c.b16 %v370, %v369
    %v459 = vpack.c.b16 %v372, %v371
    %v460 = vpack.c.b16 %v374, %v373
    %v461 = vpack.c.b16 %v376, %v375
    %v462 = vpack.c.b16 %v378, %v377
    %v463 = vpack.c.b16 %v380, %v379
    %v464 = vpack.c.b16 %v382, %v381
    %v465 = vpack.c.b16 %v384, %v383
    %v466 = vpack.c.b16 %v386, %v385
    %v467 = vpack.c.b16 %v388, %v387
    %v468 = vpack.c.b16 %v390, %v389
    %v469 = vpack.c.b16 %v392, %v391
    %v470 = vpack.c.b16 %v394, %v393
    %v471 = vpack.c.b16 %v396, %v395
    %v472 = vpack.c.b16 %v398, %v397
    %v473 = vpack.c.b16 %v400, %v399
    %v474 = vpack.c.b16 %v402, %v401
    %v475 = vpack.c.b16 %v404, %v403
    %v476 = vpack.c.b16 %v406, %v405
    %v477 = vpack.c.b16 %v408, %v407
    %v478 = vpack.c.b16 %v410, %v409
    %v479 = vpack.c.b16 %v412, %v411
    %v480 = vpack.c.b16 %v414, %v413
    %v481 = vpack.c.b16 %v416, %v415
    %v482 = vpack.c.b16 %v418, %v417
    %547 = vmatprep.subr.bf16.mxu0 0
    %548 = vmatpush1.bf16.msra.mxu0 %v426
    %549 = vmatprep.subr.bf16.mxu0 0
    %550 = vmatpush1.bf16.msra.mxu0 %v425
    %551 = vmatprep.subr.bf16.mxu0 0
    %552 = vmatpush1.bf16.msra.mxu0 %v424
    %553 = vmatprep.subr.bf16.mxu0 0
    %554 = vmatpush1.bf16.msra.mxu0 %v423
    %555 = vmatprep.subr.bf16.mxu0 0
    %556 = vmatpush1.bf16.msra.mxu0 %v422
    %557 = vmatprep.subr.bf16.mxu0 0
    %558 = vmatpush1.bf16.msra.mxu0 %v421
    %559 = vmatprep.subr.bf16.mxu0 0
    %560 = vmatpush1.bf16.msra.mxu0 %v420
    %561 = vmatprep.subr.bf16.mxu0 0
    %562 = vmatpush1.bf16.msra.mxu0 %v419
    %563 = vmatprep.subr.bf16.mxu0 0
    %564 = vmatpush2.bf16.msra.mxu0 %v434
    %565 = vmatprep.subr.bf16.mxu0 0
    %566 = vmatpush2.bf16.msra.mxu0 %v433
    %567 = vmatprep.subr.bf16.mxu0 0
    %568 = vmatpush2.bf16.msra.mxu0 %v432
    %569 = vmatprep.subr.bf16.mxu0 0
    %570 = vmatpush2.bf16.msra.mxu0 %v431
    %571 = vmatprep.subr.bf16.mxu0 0
    %572 = vmatpush2.bf16.msra.mxu0 %v430
    %573 = vmatprep.subr.bf16.mxu0 0
    %574 = vmatpush2.bf16.msra.mxu0 %v429
    %575 = vmatprep.subr.bf16.mxu0 0
    %576 = vmatpush2.bf16.msra.mxu0 %v428
    %577 = vmatprep.subr.bf16.mxu0 0
    %578 = vmatpush2.bf16.msra.mxu0 %v427
    %579 = vmatprep.mubr.bf16.mxu0 %v28
    %580 = vmatmul.mubr.bf16.gmra.mxu0 %v27
    %v581 = vpop.f32.mrf.mxu0
    %v582 = vadd.f32 0.0, %v581
    %v583 = vpop.f32.mrf.mxu0
    %v584 = vpop.f32.mrf.mxu0
    %v585 = vpop.f32.mrf.mxu0
    %586 = vdwg.mxu0
    %587 = vmatprep.subr.bf16.mxu0 0
    %588 = vmatpush1.bf16.msra.mxu0 %v442
    %589 = vmatprep.subr.bf16.mxu0 0
    %590 = vmatpush1.bf16.msra.mxu0 %v441
    %591 = vmatprep.subr.bf16.mxu0 0
    %592 = vmatpush1.bf16.msra.mxu0 %v440
    %593 = vmatprep.subr.bf16.mxu0 0
    %594 = vmatpush1.bf16.msra.mxu0 %v439
    %595 = vmatprep.subr.bf16.mxu0 0
    %596 = vmatpush1.bf16.msra.mxu0 %v438
    %597 = vmatprep.subr.bf16.mxu0 0
    %598 = vmatpush1.bf16.msra.mxu0 %v437
    %599 = vmatprep.subr.bf16.mxu0 0
    %600 = vmatpush1.bf16.msra.mxu0 %v436
    %601 = vmatprep.subr.bf16.mxu0 0
    %602 = vmatpush1.bf16.msra.mxu0 %v435
    %603 = vmatprep.subr.bf16.mxu0 0
    %604 = vmatpush2.bf16.msra.mxu0 %v450
    %605 = vmatprep.subr.bf16.mxu0 0
    %606 = vmatpush2.bf16.msra.mxu0 %v449
    %607 = vmatprep.subr.bf16.mxu0 0
    %608 = vmatpush2.bf16.msra.mxu0 %v448
    %609 = vmatprep.subr.bf16.mxu0 0
    %610 = vmatpush2.bf16.msra.mxu0 %v447
    %611 = vmatprep.subr.bf16.mxu0 0
    %612 = vmatpush2.bf16.msra.mxu0 %v446
    %613 = vmatprep.subr.bf16.mxu0 0
    %614 = vmatpush2.bf16.msra.mxu0 %v445
    %615 = vmatprep.subr.bf16.mxu0 0
    %616 = vmatpush2.bf16.msra.mxu0 %v444
    %617 = vmatprep.subr.bf16.mxu0 0
    %618 = vmatpush2.bf16.msra.mxu0 %v443
    %619 = vmatprep.mubr.bf16.mxu0 %v30
    %620 = vmatmul.mubr.bf16.gmra.mxu0 %v29
    %v621 = vpop.f32.mrf.mxu0
    %v622 = vadd.f32 %v582, %v621
    %v623 = vpop.f32.mrf.mxu0
    %v624 = vpop.f32.mrf.mxu0
    %v625 = vpop.f32.mrf.mxu0
    %626 = vdwg.mxu0
    %627 = vmatprep.subr.bf16.mxu0 0
    %628 = vmatpush1.bf16.msra.mxu0 %v458
    %629 = vmatprep.subr.bf16.mxu0 0
    %630 = vmatpush1.bf16.msra.mxu0 %v457
    %631 = vmatprep.subr.bf16.mxu0 0
    %632 = vmatpush1.bf16.msra.mxu0 %v456
    %633 = vmatprep.subr.bf16.mxu0 0
    %634 = vmatpush1.bf16.msra.mxu0 %v455
    %635 = vmatprep.subr.bf16.mxu0 0
    %636 = vmatpush1.bf16.msra.mxu0 %v454
    %637 = vmatprep.subr.bf16.mxu0 0
    %638 = vmatpush1.bf16.msra.mxu0 %v453
    %639 = vmatprep.subr.bf16.mxu0 0
    %640 = vmatpush1.bf16.msra.mxu0 %v452
    %641 = vmatprep.subr.bf16.mxu0 0
    %642 = vmatpush1.bf16.msra.mxu0 %v451
    %643 = vmatprep.subr.bf16.mxu0 0
    %644 = vmatpush2.bf16.msra.mxu0 %v466
    %645 = vmatprep.subr.bf16.mxu0 0
    %646 = vmatpush2.bf16.msra.mxu0 %v465
    %647 = vmatprep.subr.bf16.mxu0 0
    %648 = vmatpush2.bf16.msra.mxu0 %v464
    %649 = vmatprep.subr.bf16.mxu0 0
    %650 = vmatpush2.bf16.msra.mxu0 %v463
    %651 = vmatprep.subr.bf16.mxu0 0
    %652 = vmatpush2.bf16.msra.mxu0 %v462
    %653 = vmatprep.subr.bf16.mxu0 0
    %654 = vmatpush2.bf16.msra.mxu0 %v461
    %655 = vmatprep.subr.bf16.mxu0 0
    %656 = vmatpush2.bf16.msra.mxu0 %v460
    %657 = vmatprep.subr.bf16.mxu0 0
    %658 = vmatpush2.bf16.msra.mxu0 %v459
    %659 = vmatprep.mubr.bf16.mxu0 %v32
    %660 = vmatmul.mubr.bf16.gmra.mxu0 %v31
    %v661 = vpop.f32.mrf.mxu0
    %v662 = vadd.f32 %v622, %v661
    %v663 = vpop.f32.mrf.mxu0
    %v664 = vpop.f32.mrf.mxu0
    %v665 = vpop.f32.mrf.mxu0
    %666 = vdwg.mxu0
    %667 = vmatprep.subr.bf16.mxu0 0
    %668 = vmatpush1.bf16.msra.mxu0 %v474
    %669 = vmatprep.subr.bf16.mxu0 0
    %670 = vmatpush1.bf16.msra.mxu0 %v473
    %671 = vmatprep.subr.bf16.mxu0 0
    %672 = vmatpush1.bf16.msra.mxu0 %v472
    %673 = vmatprep.subr.bf16.mxu0 0
    %674 = vmatpush1.bf16.msra.mxu0 %v471
    %675 = vmatprep.subr.bf16.mxu0 0
    %676 = vmatpush1.bf16.msra.mxu0 %v470
    %677 = vmatprep.subr.bf16.mxu0 0
    %678 = vmatpush1.bf16.msra.mxu0 %v469
    %679 = vmatprep.subr.bf16.mxu0 0
    %680 = vmatpush1.bf16.msra.mxu0 %v468
    %681 = vmatprep.subr.bf16.mxu0 0
    %682 = vmatpush1.bf16.msra.mxu0 %v467
    %683 = vmatprep.subr.bf16.mxu0 0
    %684 = vmatpush2.bf16.msra.mxu0 %v482
    %685 = vmatprep.subr.bf16.mxu0 0
    %686 = vmatpush2.bf16.msra.mxu0 %v481
    %687 = vmatprep.subr.bf16.mxu0 0
    %688 = vmatpush2.bf16.msra.mxu0 %v480
    %689 = vmatprep.subr.bf16.mxu0 0
    %690 = vmatpush2.bf16.msra.mxu0 %v479
    %691 = vmatprep.subr.bf16.mxu0 0
    %692 = vmatpush2.bf16.msra.mxu0 %v478
    %693 = vmatprep.subr.bf16.mxu0 0
    %694 = vmatpush2.bf16.msra.mxu0 %v477
    %695 = vmatprep.subr.bf16.mxu0 0
    %696 = vmatpush2.bf16.msra.mxu0 %v476
    %697 = vmatprep.subr.bf16.mxu0 0
    %698 = vmatpush2.bf16.msra.mxu0 %v475
    %699 = vmatprep.mubr.bf16.mxu0 %v34
    %700 = vmatmul.mubr.bf16.gmra.mxu0 %v33
    %v701 = vpop.f32.mrf.mxu0
    %v702 = vadd.f32 %v662, %v701
    %v703 = vpop.f32.mrf.mxu0
    %v704 = vpop.f32.mrf.mxu0
    %v705 = vpop.f32.mrf.mxu0
    %706 = vdwg.mxu0
    %vm707 = vcmask 523264
    %v708 = vsel %vm707, %v702, 0.0
    %v709 = vrot.slane %v708, 4
    %v710 = vadd.f32 %v708, %v709
    %v711 = vrot.slane %v710, 2
    %v712 = vadd.f32 %v710, %v711
    %v713 = vrot.slane %v712, 1
    %v714 = vadd.f32 %v712, %v713
    %v715 = vrcp.pop 8.0
    %v716 = vmul.f32 %v714, %v715
    %v717 = vsub.f32 %v702, %v716
    %v718 = vmul.f32 %v717, %v717
    %v719 = vsel %vm707, %v718, 0.0
    %v720 = vrot.slane %v719, 4
    %v721 = vadd.f32 %v719, %v720
    %v722 = vrot.slane %v721, 2
    %v723 = vadd.f32 %v721, %v722
    %v724 = vrot.slane %v723, 1
    %v725 = vadd.f32 %v723, %v724
    %v726 = vmul.f32 %v725, %v715
    %v727 = vadd.f32 %v726, 1e-05
    %v728 = vrsqrt.pop %v727
    %v729 = vmul.f32 %v717, %v728
    %v730 = vmax.f32 %v729, 0.0
    %v731 = vld [vmem:[%s2] sm:$0xf]
    %v732 = vld [vmem:[%s2 + $0x4] sm:$0xf]
    %v733 = vld [vmem:[%s2 + $0x8] sm:$0xf]
    %v734 = vld [vmem:[%s2 + $0xc] sm:$0xf]
    %v735 = vld [vmem:[%s2 + $0x10] sm:$0xf]
    %v736 = vld [vmem:[%s2 + $0x14] sm:$0xf]
    %v737 = vld [vmem:[%s2 + $0x18] sm:$0xf]
    %v738 = vld [vmem:[%s2 + $0x1c] sm:$0xf]
    %v739 = vld [vmem:[%s2 + $0x20] sm:$0xf]
    %v740 = vld [vmem:[%s2 + $0x24] sm:$0xf]
    %v741 = vld [vmem:[%s2 + $0x28] sm:$0xf]
    %v742 = vld [vmem:[%s2 + $0x2c] sm:$0xf]
    %v743 = vld [vmem:[%s2 + $0x30] sm:$0xf]
    %v744 = vld [vmem:[%s2 + $0x34] sm:$0xf]
    %v745 = vld [vmem:[%s2 + $0x38] sm:$0xf]
    %v746 = vld [vmem:[%s2 + $0x3c] sm:$0xf]
    %v747 = vld [vmem:[%s2 + $0x40] sm:$0xf]
    %v748 = vld [vmem:[%s2 + $0x44] sm:$0xf]
    %v749 = vld [vmem:[%s2 + $0x48] sm:$0xf]
    %v750 = vld [vmem:[%s2 + $0x4c] sm:$0xf]
    %v751 = vld [vmem:[%s2 + $0x50] sm:$0xf]
    %v752 = vld [vmem:[%s2 + $0x54] sm:$0xf]
    %v753 = vld [vmem:[%s2 + $0x58] sm:$0xf]
    %v754 = vld [vmem:[%s2 + $0x5c] sm:$0xf]
    %v755 = vpack.c.bf16 %v730, %v730
    %v764 = vunpack.c.l.b16 %v731
    %v765 = vunpack.c.l.b16 %v732
    %v766 = vunpack.c.l.b16 %v733
    %v767 = vunpack.c.l.b16 %v734
    %v768 = vunpack.c.l.b16 %v735
    %v769 = vunpack.c.l.b16 %v736
    %v770 = vunpack.c.l.b16 %v737
    %v771 = vunpack.c.l.b16 %v738
    %v772 = vpack.c.b16 %v765, %v764
    %v773 = vpack.c.b16 %v767, %v766
    %v774 = vpack.c.b16 %v769, %v768
    %v775 = vpack.c.b16 %v771, %v770
    %v781 = vsel %vm707, %v755, 0
    %783 = vmatprep.subr.bf16.mxu0 0
    %784 = vmatpush1.bf16.msra.mxu0 0
    %785 = vmatprep.subr.bf16.mxu0 0
    %786 = vmatpush1.bf16.msra.mxu0 0
    %787 = vmatprep.subr.bf16.mxu0 0
    %788 = vmatpush1.bf16.msra.mxu0 0
    %789 = vmatprep.subr.bf16.mxu0 0
    %790 = vmatpush1.bf16.msra.mxu0 0
    %791 = vmatprep.subr.bf16.mxu0 0
    %792 = vmatpush1.bf16.msra.mxu0 %v775
    %793 = vmatprep.subr.bf16.mxu0 0
    %794 = vmatpush1.bf16.msra.mxu0 %v774
    %795 = vmatprep.subr.bf16.mxu0 0
    %796 = vmatpush1.bf16.msra.mxu0 %v773
    %797 = vmatprep.subr.bf16.mxu0 0
    %798 = vmatpush1.bf16.msra.mxu0 %v772
    %799 = vmatprep.subr.bf16.mxu0 0
    %800 = vmatpush2.bf16.msra.mxu0 0
    %801 = vmatprep.subr.bf16.mxu0 0
    %802 = vmatpush2.bf16.msra.mxu0 0
    %803 = vmatprep.subr.bf16.mxu0 0
    %804 = vmatpush2.bf16.msra.mxu0 0
    %805 = vmatprep.subr.bf16.mxu0 0
    %806 = vmatpush2.bf16.msra.mxu0 0
    %807 = vmatprep.subr.bf16.mxu0 0
    %808 = vmatpush2.bf16.msra.mxu0 0
    %809 = vmatprep.subr.bf16.mxu0 0
    %810 = vmatpush2.bf16.msra.mxu0 0
    %811 = vmatprep.subr.bf16.mxu0 0
    %812 = vmatpush2.bf16.msra.mxu0 0
    %813 = vmatprep.subr.bf16.mxu0 0
    %814 = vmatpush2.bf16.msra.mxu0 0
    %815 = vmatprep.mubr.bf16.mxu0 0
    %816 = vmatmul.mubr.bf16.gmra.mxu0 %v781
    %v817 = vpop.f32.mrf.mxu0
    %v818 = vadd.f32 0.0, %v817
    %v819 = vpop.f32.mrf.mxu0
    %v820 = vpop.f32.mrf.mxu0
    %v821 = vpop.f32.mrf.mxu0
    %822 = vdwg.mxu0
    %v823 = vrot.slane %v818, 4
    %v824 = vadd.f32 %v818, %v823
    %v825 = vrot.slane %v824, 2
    %v826 = vadd.f32 %v824, %v825
    %v827 = vrot.slane %v826, 1
    %v828 = vadd.f32 %v826, %v827
    %v829 = vmul.f32 %v828, %v715
    %v830 = vsub.f32 %v818, %v829
    %v831 = vmul.f32 %v830, %v830
    %v832 = vrot.slane %v831, 4
    %v833 = vadd.f32 %v831, %v832
    %v834 = vrot.slane %v833, 2
    %v835 = vadd.f32 %v833, %v834
    %v836 = vrot.slane %v835, 1
    %v837 = vadd.f32 %v835, %v836
    %v838 = vmul.f32 %v837, %v715
    %v839 = vadd.f32 %v838, 1e-05
    %v840 = vrsqrt.pop %v839
    %v841 = vmul.f32 %v830, %v840
    %v842 = vmax.f32 %v841, 0.0
    %v843 = vpack.c.bf16 %v842, %v842
    %v844 = vld [vmem:[%s3] sm:$0x1]
    %v846 = vlaneseq
    %v847 = vshrl.u32 %v846, 7
    %v848 = vsub.s32 0, %v847
    %v849 = vrot.slane %v844, %v848
    %v867 = vunpack.c.l.b16 %v739
    %v868 = vunpack.c.l.b16 %v740
    %v869 = vunpack.c.l.b16 %v741
    %v870 = vunpack.c.l.b16 %v742
    %v871 = vunpack.c.l.b16 %v743
    %v872 = vunpack.c.l.b16 %v744
    %v873 = vunpack.c.l.b16 %v745
    %v874 = vunpack.c.l.b16 %v746
    %v875 = vunpack.c.l.b16 %v747
    %v876 = vunpack.c.l.b16 %v748
    %v877 = vunpack.c.l.b16 %v749
    %v878 = vunpack.c.l.b16 %v750
    %v879 = vunpack.c.l.b16 %v751
    %v880 = vunpack.c.l.b16 %v752
    %v881 = vunpack.c.l.b16 %v753
    %v882 = vunpack.c.l.b16 %v754
    %v883 = vpack.c.b16 %v868, %v867
    %v884 = vpack.c.b16 %v870, %v869
    %v885 = vpack.c.b16 %v872, %v871
    %v886 = vpack.c.b16 %v874, %v873
    %v887 = vpack.c.b16 %v876, %v875
    %v888 = vpack.c.b16 %v878, %v877
    %v889 = vpack.c.b16 %v880, %v879
    %v890 = vpack.c.b16 %v882, %v881
    %899 = vmatprep.subr.bf16.mxu0 0
    %900 = vmatpush1.bf16.msra.mxu0 %v890
    %901 = vmatprep.subr.bf16.mxu0 0
    %902 = vmatpush1.bf16.msra.mxu0 %v889
    %903 = vmatprep.subr.bf16.mxu0 0
    %904 = vmatpush1.bf16.msra.mxu0 %v888
    %905 = vmatprep.subr.bf16.mxu0 0
    %906 = vmatpush1.bf16.msra.mxu0 %v887
    %907 = vmatprep.subr.bf16.mxu0 0
    %908 = vmatpush1.bf16.msra.mxu0 %v886
    %909 = vmatprep.subr.bf16.mxu0 0
    %910 = vmatpush1.bf16.msra.mxu0 %v885
    %911 = vmatprep.subr.bf16.mxu0 0
    %912 = vmatpush1.bf16.msra.mxu0 %v884
    %913 = vmatprep.subr.bf16.mxu0 0
    %914 = vmatpush1.bf16.msra.mxu0 %v883
    %915 = vmatprep.subr.bf16.mxu0 0
    %916 = vmatpush2.bf16.msra.mxu0 0
    %917 = vmatprep.subr.bf16.mxu0 0
    %918 = vmatpush2.bf16.msra.mxu0 0
    %919 = vmatprep.subr.bf16.mxu0 0
    %920 = vmatpush2.bf16.msra.mxu0 0
    %921 = vmatprep.subr.bf16.mxu0 0
    %922 = vmatpush2.bf16.msra.mxu0 0
    %923 = vmatprep.subr.bf16.mxu0 0
    %924 = vmatpush2.bf16.msra.mxu0 0
    %925 = vmatprep.subr.bf16.mxu0 0
    %926 = vmatpush2.bf16.msra.mxu0 0
    %927 = vmatprep.subr.bf16.mxu0 0
    %928 = vmatpush2.bf16.msra.mxu0 0
    %929 = vmatprep.subr.bf16.mxu0 0
    %930 = vmatpush2.bf16.msra.mxu0 0
    %931 = vmatprep.mubr.bf16.mxu0 0
    %932 = vmatmul.mubr.bf16.gmra.mxu0 %v843
    %v933 = vpop.f32.mrf.mxu0
    %v934 = vadd.f32 %v849, %v933
    %v935 = vpop.f32.mrf.mxu0
    %v936 = vpop.f32.mrf.mxu0
    %v937 = vpop.f32.mrf.mxu0
    %938 = vdwg.mxu0
    %939 = vmax.xlane.f32.xlu0 %v934
    %v940 = vpop.xlane.xlu0 %939
    %v941 = vsub.f32 %v934, %v940
    %v942 = vmul.f32 %v941, 1.442695
    %v943 = vpow.pop %v942
    %944 = vadd.xlane.f32.xlu0 %v943
    %v945 = vpop.xlane.xlu0 %944
    %v946 = vrcp.pop %v945
    %v947 = vmul.f32 %v943, %v946
    %948 = vst [vmem:[#allocation2] sm:$0xff] %v947
    // Predicated region
    $region18: #{fnn_forward.1} parent=1 // pred_check
      _
    $region19: #{fnn_forward.1} parent=1 // pred_check_branch
      %950 = sbr.rel (0) target = $region21
    $region20: #{fnn_forward.1} parent=1 // pred_region
      %s952 = ssub.s32 128, 128
      %953 = vsyncadd [#allocation3], %s952
      %s955 = sshll.u32 [#allocation2], 4
      %s956 = int_to_ptr.vmem [resolvable:$true] %s955
      %958 = dma.vmem_to_hbm [thread:$0]  %s956, 128, %s4, [#allocation3]
    $region21: #{fnn_forward.1} parent=1 // pred_fallthru
      _
    // Predicated region
    $region22: #{fnn_forward.1} parent=1 // pred_check
      _
    $region23: #{fnn_forward.1} parent=1 // pred_check_branch
      %960 = sbr.rel (0) target = $region25
    $region24: #{fnn_forward.1} parent=1 // pred_region
      %961 = dma.done [#allocation3], 128
    $region25: #{fnn_forward.1} parent=1 // pred_fallthru
      _
    %962 = vsyncpa [#allocation3], 1

</llo_original>
